<compile_context>
chip_gen: v6e
topology: v6e:2x2x1
jax: 0.10.0
libtpu: 0.0.40
codegen_flags: <defaults>
</compile_context>

<pallas_src>
import math
from functools import partial

import jax
import jax.numpy as jnp
from jax import lax
from jax.experimental import pallas as pl
from jax.experimental.pallas import tpu as pltpu


# ---------------------------------------------------------------------------
# Small helpers
# ---------------------------------------------------------------------------
def _round_up(x, m):
    return ((x + m - 1) // m) * m


def _tpu_defaults():
    """(q_tile, vmem_limit_bytes) tuned per TPU generation."""
    try:
        kind = jax.devices()[0].device_kind.lower()
    except Exception:
        kind = ""
    if "7" in kind:                       # v7x: 64 MiB VMEM/TC -> smaller tile, headroom
        return 256, 56 * 1024 * 1024
    return 512, 100 * 1024 * 1024         # v5e / v6e: 128 MiB VMEM


def _single_buffered():
    """pl.Buffered(1) if this jax supports it (single-buffer constant blocks)."""
    try:
        return pl.Buffered(1)
    except Exception:
        try:
            return pl.Buffered(buffer_count=1)
        except Exception:
            return None


_SINGLE_BUF = _single_buffered()


def _const_spec(shape):
    """BlockSpec for a grid-invariant operand: constant index map, single-buffered."""
    imap = lambda *_: (0,) * len(shape)
    if _SINGLE_BUF is not None:
        try:
            return pl.BlockSpec(shape, imap, pipeline_mode=_SINGLE_BUF)
        except Exception:
            pass
    return pl.BlockSpec(shape, imap)


# ---------------------------------------------------------------------------
# Kernel 1: K/V projections, head-split, one batch element per grid step.
# ---------------------------------------------------------------------------
def _kv_proj_kernel(y_ref, wk_ref, bk_ref, wv_ref, bv_ref, ko_ref, vo_ref,
                    *, num_heads, d_k):
    """y_ref: (Sy, D); wk/wv: (D, D) pre-transposed; bk/bv: (1, D) f32;
       ko/vo: (H, Sy, d_k) head-split K/V in compute dtype."""
    y = y_ref[...]
    k = jnp.dot(y, wk_ref[...], preferred_element_type=jnp.float32) + bk_ref[...]
    v = jnp.dot(y, wv_ref[...], preferred_element_type=jnp.float32) + bv_ref[...]
    for h in range(num_heads):            # static slices, lane-aligned when d_k % 128 == 0
        ko_ref[h] = k[:, h * d_k:(h + 1) * d_k].astype(ko_ref.dtype)
        vo_ref[h] = v[:, h * d_k:(h + 1) * d_k].astype(vo_ref.dtype)


# ---------------------------------------------------------------------------
# Kernel 2: attention for one (batch element, query tile).
# ---------------------------------------------------------------------------
def _mha_kernel(x_ref, k_ref, v_ref, maskadd_ref,
                wq_ref, bq_ref, wo_ref, bo_ref,
                o_ref, q_scr, acc_ref, *, num_heads, d_k):
    """
    x_ref    : (TQ, D)      query-tile activations (compute dtype)
    k_ref    : (H, Sy, dk)  head-split keys for this batch element
    v_ref    : (H, Sy, dk)  head-split values
    maskadd  : (1, Sy)      precomputed additive mask (1-mask)*-1e4, f32
    wq_ref   : (D, D)       pre-transposed, 1/sqrt(dk)-scaled Q projection
    bq_ref   : (1, D)       f32, pre-scaled
    wo_ref   : (H, dk, D)   output projection, head-split along its input dim
    bo_ref   : (1, D)       f32
    o_ref    : (TQ, D)
    q_scr    : VMEM (H, TQ, dk)  head-split Q (compute dtype)
    acc_ref  : VMEM (TQ, D) f32  fused output-projection accumulator
    """
    H, dk = num_heads, d_k

    # Q projection once per tile (one wide-N matmul); head-split via static
    # lane-aligned slice stores so the per-head loop can index dynamically.
    q = jnp.dot(x_ref[...], wq_ref[...],
                preferred_element_type=jnp.float32) + bq_ref[...]
    for h in range(H):
        q_scr[h] = q[:, h * dk:(h + 1) * dk].astype(q_scr.dtype)

    neg = maskadd_ref[...]                          # (1, Sy), broadcast over queries
    acc_ref[...] = jnp.zeros_like(acc_ref)

    # One head at a time: live f32 intermediates capped at (TQ, Sy) + (TQ, D).
    def head_body(h, carry):
        qh = q_scr[h]                               # (TQ, dk)
        kh = k_ref[h]                               # (Sy, dk)
        vh = v_ref[h]                               # (Sy, dk)
        # scores: contract over dk, no explicit transpose of K.
        s = lax.dot_general(qh, kh, (((1,), (1,)), ((), ())),
                            preferred_element_type=jnp.float32)       # (TQ, Sy)
        s = s + neg
        s = s - jnp.max(s, axis=-1, keepdims=True)
        p = jnp.exp(s)
        p = p * pl.reciprocal(jnp.sum(p, axis=-1, keepdims=True), approx=True)
        z = jnp.dot(p.astype(vh.dtype), vh,
                    preferred_element_type=jnp.float32)                # (TQ, dk)
        # fused output projection: accumulate z_h @ Wo_h into (TQ, D).
        acc_ref[...] += jnp.dot(z.astype(wo_ref.dtype), wo_ref[h],
                                preferred_element_type=jnp.float32)
        return carry

    lax.fori_loop(0, H, head_body, 0)

    o_ref[...] = (acc_ref[...] + bo_ref[...]).astype(o_ref.dtype)


# ---------------------------------------------------------------------------
# Wrapper
# ---------------------------------------------------------------------------
def multi_head_attention(x, y, mask, params, *, num_heads, q_tile=None,
                         compute_dtype=jnp.bfloat16):
    """x: (B, Sx, D) attender, y: (B, Sy, D) attendee, mask: (B, Sy) in {0,1} or None.

    params = (wq, bq, wk, bk, wv, bv, wo, bo), weights in torch Linear layout
    (out, in).  Dropout is identity (eval mode).
    """
    x = jnp.asarray(x)
    y = jnp.asarray(y)
    B, Sx, D = x.shape
    _, Sy, _ = y.shape
    assert D % num_heads == 0
    d_k = D // num_heads
    out_dtype = x.dtype
    cdt = compute_dtype

    wq, bq, wk, bk, wv, bv, wo, bo = (jnp.asarray(p) for p in params)

    # torch (out, in) -> (in, out); fold 1/sqrt(d_k) into the Q projection.
    # Biases stay f32 and are added after the f32-accumulated matmuls.
    scale = 1.0 / math.sqrt(float(d_k))
    wq_t = (wq.T * scale).astype(cdt)
    bq_s = (bq.astype(jnp.float32) * scale).reshape(1, D)
    wk_t = wk.T.astype(cdt)
    wv_t = wv.T.astype(cdt)
    wo_h = wo.T.reshape(num_heads, d_k, D).astype(cdt)   # head-split input dim
    bk2 = bk.astype(jnp.float32).reshape(1, D)
    bv2 = bv.astype(jnp.float32).reshape(1, D)
    bo2 = bo.astype(jnp.float32).reshape(1, D)

    if mask is None:
        mask_add = jnp.zeros((B, 1, Sy), jnp.float32)
    else:
        mask_add = ((1.0 - jnp.asarray(mask).astype(jnp.float32)) * -10000.0
                    ).reshape(B, 1, Sy)

    x_c = x.astype(cdt)
    y_c = y.astype(cdt)

    default_tile, vmem_limit = _tpu_defaults()

    # ---- stage 1: K/V projections (head-split), streamed per batch element ----
    kv_kernel = partial(_kv_proj_kernel, num_heads=num_heads, d_k=d_k)
    k_hs, v_hs = pl.pallas_call(
        kv_kernel,
        out_shape=(jax.ShapeDtypeStruct((B, num_heads, Sy, d_k), cdt),
                   jax.ShapeDtypeStruct((B, num_heads, Sy, d_k), cdt)),
        grid=(B,),
        in_specs=[
            pl.BlockSpec((None, Sy, D), lambda b: (b, 0, 0)),     # y
            _const_spec((D, D)),                                  # Wk^T
            _const_spec((1, D)),                                  # bk
            _const_spec((D, D)),                                  # Wv^T
            _const_spec((1, D)),                                  # bv
        ],
        out_specs=(pl.BlockSpec((None, num_heads, Sy, d_k), lambda b: (b, 0, 0, 0)),
                   pl.BlockSpec((None, num_heads, Sy, d_k), lambda b: (b, 0, 0, 0))),
        compiler_params=pltpu.CompilerParams(
            dimension_semantics=("parallel",),
            vmem_limit_bytes=vmem_limit),
    )(y_c, wk_t, bk2, wv_t, bv2)

    # ---- stage 2: attention over (batch, query tile) ----
    if q_tile is None:
        q_tile = default_tile
    q_tile = _round_up(max(8, min(q_tile, _round_up(Sx, 8))), 8)
    Sx_pad = _round_up(Sx, q_tile)
    if Sx_pad != Sx:                      # ragged Sx: pad queries, slice output
        x_c = jnp.pad(x_c, ((0, 0), (0, Sx_pad - Sx), (0, 0)))
    n_q = Sx_pad // q_tile

    mha_kernel = partial(_mha_kernel, num_heads=num_heads, d_k=d_k)
    out = pl.pallas_call(
        mha_kernel,
        out_shape=jax.ShapeDtypeStruct((B, Sx_pad, D), out_dtype),
        grid=(B, n_q),
        in_specs=[
            pl.BlockSpec((None, q_tile, D), lambda b, qi: (b, qi, 0)),             # x tile
            pl.BlockSpec((None, num_heads, Sy, d_k), lambda b, qi: (b, 0, 0, 0)),  # K
            pl.BlockSpec((None, num_heads, Sy, d_k), lambda b, qi: (b, 0, 0, 0)),  # V
            pl.BlockSpec((None, 1, Sy), lambda b, qi: (b, 0, 0)),                  # mask add
            _const_spec((D, D)),                                                   # Wq^T (scaled)
            _const_spec((1, D)),                                                   # bq (scaled)
            _const_spec((num_heads, d_k, D)),                                      # Wo^T head-split
            _const_spec((1, D)),                                                   # bo
        ],
        out_specs=pl.BlockSpec((None, q_tile, D), lambda b, qi: (b, qi, 0)),
        scratch_shapes=[
            pltpu.VMEM((num_heads, q_tile, d_k), cdt),     # head-split Q
            pltpu.VMEM((q_tile, D), jnp.float32),          # output accumulator
        ],
        compiler_params=pltpu.CompilerParams(
            dimension_semantics=("parallel", "parallel"),
            vmem_limit_bytes=vmem_limit),
    )(x_c, k_hs, v_hs, mask_add, wq_t, bq_s, wo_h, bo2)

    if Sx_pad != Sx:
        out = out[:, :Sx, :]
    return out


# ---------------------------------------------------------------------------
# Pure-JAX reference (mirrors the PyTorch forward, dropout = identity)
# ---------------------------------------------------------------------------
def mha_reference(x, y, mask, params, *, num_heads):
    B, Sx, D = x.shape
    d_k = D // num_heads
    wq, bq, wk, bk, wv, bv, wo, bo = params

    def lin(v, w, b):
        return v @ w.T + b

    def split_heads(t):                       # (B, S, D) -> (B, H, S, dk)
        return t.reshape(B, -1, num_heads, d_k).transpose(0, 2, 1, 3)

    q = split_heads(lin(x, wq, bq))
    k = split_heads(lin(y, wk, bk))
    v = split_heads(lin(y, wv, bv))

    scores = jnp.einsum("bhqd,bhkd->bhqk", q, k) / math.sqrt(d_k)
    if mask is not None:
        scores = scores + (1.0 - mask[:, None, None, :]) * -10000.0
    p = jax.nn.softmax(scores, axis=-1)
    z = jnp.einsum("bhqk,bhkd->bhqd", p, v)
    z = z.transpose(0, 2, 1, 3).reshape(B, Sx, D)
    return lin(z, wo, bo)


# ---------------------------------------------------------------------------
if __name__ == "__main__":
    # Small but lane-realistic: d_k = 128 (one lane tile), Sx != Sy (cross-
    # attention shapes), Sx not a multiple of the query tile (pads 12 -> 16,
    # two query tiles).
    B, Sx, Sy, D, H = 2, 12, 16, 256, 2
    TQ = 8

    key = jax.random.PRNGKey(0)
    keys = jax.random.split(key, 10)

    x = jax.random.normal(keys[0], (B, Sx, D), dtype=jnp.float32)
    y = jax.random.normal(keys[1], (B, Sy, D), dtype=jnp.float32)

    # deterministic 0/1 mask: batch 0 attends everywhere, batch 1 masks last 4 keys
    mask = jnp.ones((B, Sy), dtype=jnp.float32)
    mask = mask.at[1, -4:].set(0.0)

    init_scale = 1.0 / math.sqrt(D)

    def mk_linear(kw, kb):
        w = jax.random.uniform(kw, (D, D), minval=-init_scale, maxval=init_scale,
                               dtype=jnp.float32)
        b = jax.random.uniform(kb, (D,), minval=-init_scale, maxval=init_scale,
                               dtype=jnp.float32)
        return w, b

    wq, bq = mk_linear(keys[2], keys[3])
    wk, bk = mk_linear(keys[4], keys[5])
    wv, bv = mk_linear(keys[6], keys[7])
    wo, bo = mk_linear(keys[8], keys[9])
    params = (wq, bq, wk, bk, wv, bv, wo, bo)

    ref = mha_reference(x, y, mask, params, num_heads=H)

    # f32 compute path: tight parity with the PyTorch-style reference.
    out_f32 = multi_head_attention(x, y, mask, params, num_heads=H,
                                   q_tile=TQ, compute_dtype=jnp.float32)
    out_f32 = jax.block_until_ready(out_f32)
    assert out_f32.shape == (B, Sx, D)
    assert jnp.allclose(out_f32, ref, atol=5e-3, rtol=5e-3), "f32 path mismatch"

    # bf16 MXU path (default): looser tolerance for bf16 operands.
    out_bf16 = multi_head_attention(x, y, mask, params, num_heads=H, q_tile=TQ)
    out_bf16 = jax.block_until_ready(out_bf16)
    assert out_bf16.shape == (B, Sx, D)
    assert jnp.allclose(out_bf16, ref, atol=5e-2, rtol=5e-2), "bf16 path mismatch"

    print("KERNEL_OK")
</pallas_src>

<mosaic_0001>
module attributes {stable_mosaic.version = 11 : i64} {
  func.func @_kv_proj_kernel(%arg0: i32, %arg1: memref<1x16x256xf32, #tpu.memory_space<vmem>>, %arg2: memref<256x256xf32, #tpu.memory_space<vmem>>, %arg3: memref<1x256xf32, #tpu.memory_space<vmem>>, %arg4: memref<256x256xf32, #tpu.memory_space<vmem>>, %arg5: memref<1x256xf32, #tpu.memory_space<vmem>>, %arg6: memref<1x2x16x128xf32, #tpu.memory_space<vmem>>, %arg7: memref<1x2x16x128xf32, #tpu.memory_space<vmem>>) attributes {dimension_semantics = [#tpu.dimension_semantics<parallel>], iteration_bounds = array<i64: 2>, scalar_prefetch = 0 : i64, scratch_operands = 0 : i64, tpu.core_type = #tpu.core_type<tc>, window_params = [{transform_indices = @transform_0, window_bounds = array<i64: 1, 16, 256>}, {pipeline_mode = #tpu.pipeline_mode<synchronous>, transform_indices = @transform_1, window_bounds = array<i64: 256, 256>}, {pipeline_mode = #tpu.pipeline_mode<synchronous>, transform_indices = @transform_2, window_bounds = array<i64: 1, 256>}, {pipeline_mode = #tpu.pipeline_mode<synchronous>, transform_indices = @transform_3, window_bounds = array<i64: 256, 256>}, {pipeline_mode = #tpu.pipeline_mode<synchronous>, transform_indices = @transform_4, window_bounds = array<i64: 1, 256>}, {transform_indices = @transform_5, window_bounds = array<i64: 1, 2, 16, 128>}, {transform_indices = @transform_6, window_bounds = array<i64: 1, 2, 16, 128>}]} {
    %c0 = arith.constant 0 : index
    %c0_0 = arith.constant 0 : index
    %c0_1 = arith.constant 0 : index
    %0 = vector.load %arg1[%c0, %c0_0, %c0_1] : memref<1x16x256xf32, #tpu.memory_space<vmem>>, vector<1x16x256xf32>
    %1 = vector.shape_cast %0 : vector<1x16x256xf32> to vector<16x256xf32>
    %c0_2 = arith.constant 0 : index
    %c0_3 = arith.constant 0 : index
    %2 = vector.load %arg2[%c0_2, %c0_3] : memref<256x256xf32, #tpu.memory_space<vmem>>, vector<256x256xf32>
    %cst = arith.constant dense<0.000000e+00> : vector<16x256xf32>
    %3 = tpu.matmul %1, %2, %cst {dimension_numbers = #tpu.dot_dimension_numbers<[1], [0], [0], [1], [0, 0, 1, 1], [], []>} : vector<16x256xf32>, vector<256x256xf32>, vector<16x256xf32> -> vector<16x256xf32>
    %c0_4 = arith.constant 0 : index
    %c0_5 = arith.constant 0 : index
    %4 = vector.load %arg3[%c0_4, %c0_5] : memref<1x256xf32, #tpu.memory_space<vmem>>, vector<1x256xf32>
    %5 = vector.broadcast %4 : vector<1x256xf32> to vector<16x256xf32>
    %6 = arith.addf %3, %5 : vector<16x256xf32>
    %c0_6 = arith.constant 0 : index
    %c0_7 = arith.constant 0 : index
    %7 = vector.load %arg4[%c0_6, %c0_7] : memref<256x256xf32, #tpu.memory_space<vmem>>, vector<256x256xf32>
    %cst_8 = arith.constant dense<0.000000e+00> : vector<16x256xf32>
    %8 = tpu.matmul %1, %7, %cst_8 {dimension_numbers = #tpu.dot_dimension_numbers<[1], [0], [0], [1], [0, 0, 1, 1], [], []>} : vector<16x256xf32>, vector<256x256xf32>, vector<16x256xf32> -> vector<16x256xf32>
    %c0_9 = arith.constant 0 : index
    %c0_10 = arith.constant 0 : index
    %9 = vector.load %arg5[%c0_9, %c0_10] : memref<1x256xf32, #tpu.memory_space<vmem>>, vector<1x256xf32>
    %10 = vector.broadcast %9 : vector<1x256xf32> to vector<16x256xf32>
    %11 = arith.addf %8, %10 : vector<16x256xf32>
    %12 = vector.extract_strided_slice %6 {offsets = [0, 0], sizes = [16, 128], strides = [1, 1]} : vector<16x256xf32> to vector<16x128xf32>
    %c0_11 = arith.constant 0 : index
    %c0_12 = arith.constant 0 : index
    %c0_13 = arith.constant 0 : index
    %c0_14 = arith.constant 0 : index
    %13 = vector.load %arg6[%c0_11, %c0_12, %c0_13, %c0_14] : memref<1x2x16x128xf32, #tpu.memory_space<vmem>>, vector<1x1x16x128xf32>
    %14 = vector.shape_cast %13 : vector<1x1x16x128xf32> to vector<16x128xf32>
    %15 = vector.shape_cast %12 : vector<16x128xf32> to vector<1x1x16x128xf32>
    tpu.vector_store %arg6[%c0_11, %c0_12, %c0_13, %c0_14], %15 {strides = array<i32>} : memref<1x2x16x128xf32, #tpu.memory_space<vmem>>, vector<1x1x16x128xf32>,
    %16 = vector.extract_strided_slice %11 {offsets = [0, 0], sizes = [16, 128], strides = [1, 1]} : vector<16x256xf32> to vector<16x128xf32>
    %c0_15 = arith.constant 0 : index
    %c0_16 = arith.constant 0 : index
    %c0_17 = arith.constant 0 : index
    %c0_18 = arith.constant 0 : index
    %17 = vector.load %arg7[%c0_15, %c0_16, %c0_17, %c0_18] : memref<1x2x16x128xf32, #tpu.memory_space<vmem>>, vector<1x1x16x128xf32>
    %18 = vector.shape_cast %17 : vector<1x1x16x128xf32> to vector<16x128xf32>
    %19 = vector.shape_cast %16 : vector<16x128xf32> to vector<1x1x16x128xf32>
    tpu.vector_store %arg7[%c0_15, %c0_16, %c0_17, %c0_18], %19 {strides = array<i32>} : memref<1x2x16x128xf32, #tpu.memory_space<vmem>>, vector<1x1x16x128xf32>,
    %20 = vector.extract_strided_slice %6 {offsets = [0, 128], sizes = [16, 128], strides = [1, 1]} : vector<16x256xf32> to vector<16x128xf32>
    %c0_19 = arith.constant 0 : index
    %c1 = arith.constant 1 : index
    %c0_20 = arith.constant 0 : index
    %c0_21 = arith.constant 0 : index
    %21 = vector.load %arg6[%c0_19, %c1, %c0_20, %c0_21] : memref<1x2x16x128xf32, #tpu.memory_space<vmem>>, vector<1x1x16x128xf32>
    %22 = vector.shape_cast %21 : vector<1x1x16x128xf32> to vector<16x128xf32>
    %23 = vector.shape_cast %20 : vector<16x128xf32> to vector<1x1x16x128xf32>
    tpu.vector_store %arg6[%c0_19, %c1, %c0_20, %c0_21], %23 {strides = array<i32>} : memref<1x2x16x128xf32, #tpu.memory_space<vmem>>, vector<1x1x16x128xf32>,
    %24 = vector.extract_strided_slice %11 {offsets = [0, 128], sizes = [16, 128], strides = [1, 1]} : vector<16x256xf32> to vector<16x128xf32>
    %c0_22 = arith.constant 0 : index
    %c1_23 = arith.constant 1 : index
    %c0_24 = arith.constant 0 : index
    %c0_25 = arith.constant 0 : index
    %25 = vector.load %arg7[%c0_22, %c1_23, %c0_24, %c0_25] : memref<1x2x16x128xf32, #tpu.memory_space<vmem>>, vector<1x1x16x128xf32>
    %26 = vector.shape_cast %25 : vector<1x1x16x128xf32> to vector<16x128xf32>
    %27 = vector.shape_cast %24 : vector<16x128xf32> to vector<1x1x16x128xf32>
    tpu.vector_store %arg7[%c0_22, %c1_23, %c0_24, %c0_25], %27 {strides = array<i32>} : memref<1x2x16x128xf32, #tpu.memory_space<vmem>>, vector<1x1x16x128xf32>,
    return
  }
  func.func @transform_0(%arg0: i32) -> (i32, i32, i32) {
    %c0_i32 = arith.constant 0 : i32
    %c0_i32_0 = arith.constant 0 : i32
    %c0_i32_1 = arith.constant 0 : i32
    return %arg0, %c0_i32, %c0_i32_0 : i32, i32, i32
  }
  func.func @transform_1(%arg0: i32) -> (i32, i32) {
    %c0_i32 = arith.constant 0 : i32
    %c0_i32_0 = arith.constant 0 : i32
    %c0_i32_1 = arith.constant 0 : i32
    return %c0_i32, %c0_i32_0 : i32, i32
  }
  func.func @transform_2(%arg0: i32) -> (i32, i32) {
    %c0_i32 = arith.constant 0 : i32
    %c0_i32_0 = arith.constant 0 : i32
    %c0_i32_1 = arith.constant 0 : i32
    return %c0_i32, %c0_i32_0 : i32, i32
  }
  func.func @transform_3(%arg0: i32) -> (i32, i32) {
    %c0_i32 = arith.constant 0 : i32
    %c0_i32_0 = arith.constant 0 : i32
    %c0_i32_1 = arith.constant 0 : i32
    return %c0_i32, %c0_i32_0 : i32, i32
  }
  func.func @transform_4(%arg0: i32) -> (i32, i32) {
    %c0_i32 = arith.constant 0 : i32
    %c0_i32_0 = arith.constant 0 : i32
    %c0_i32_1 = arith.constant 0 : i32
    return %c0_i32, %c0_i32_0 : i32, i32
  }
  func.func @transform_5(%arg0: i32) -> (i32, i32, i32, i32) {
    %c0_i32 = arith.constant 0 : i32
    %c0_i32_0 = arith.constant 0 : i32
    %c0_i32_1 = arith.constant 0 : i32
    %c0_i32_2 = arith.constant 0 : i32
    return %arg0, %c0_i32, %c0_i32_0, %c0_i32_1 : i32, i32, i32, i32
  }
  func.func @transform_6(%arg0: i32) -> (i32, i32, i32, i32) {
    %c0_i32 = arith.constant 0 : i32
    %c0_i32_0 = arith.constant 0 : i32
    %c0_i32_1 = arith.constant 0 : i32
    %c0_i32_2 = arith.constant 0 : i32
    return %arg0, %c0_i32, %c0_i32_0, %c0_i32_1 : i32, i32, i32, i32
  }
}

</mosaic_0001>

<llo_original>
// kernel: tpu_custom_call.1
$region0: #{tpu_custom_call.1}
  #allocation0 [shape = 'u32[]', space=smem, size = 0x4, offset = 0x4, fixed_abs, tag = 'smem constant byte address 0x4 - core index']
  #allocation1 [shape = 'u32[144,128]{1,0:T(1,128)}', space=vmem, size = 0x12000, scoped, tag = 'internal scratch']
  %s0 = inlined_call_operand.hbm [shape: f32[2,16,256], index: 0, kind: input, shape index: {}]
  %s1 = inlined_call_operand.hbm [shape: f32[256,256], index: 1, kind: input, shape index: {}]
  %s2 = inlined_call_operand.vmem [shape: f32[1,256], index: 2, kind: input, shape index: {}]
  %s3 = inlined_call_operand.hbm [shape: f32[256,256], index: 3, kind: input, shape index: {}]
  %s4 = inlined_call_operand.vmem [shape: f32[1,256], index: 4, kind: input, shape index: {}]
  %s5 = inlined_call_operand.hbm [shape: f32[2,2,16,128], index: 5, kind: output, shape index: {0}]
  %s6 = inlined_call_operand.hbm [shape: f32[2,2,16,128], index: 6, kind: output, shape index: {1}]
  %7 = xla_tuple %s5, %s6
  %s8 = sld [smem:[#allocation0]]
  $region73: #{tpu_custom_call.1} parent=0
    _
  %s10 = ssub.s32 1, %s8
  %s11 = scalar_select 0, %s10, %s8
  $region1: #{tpu_custom_call.1} parent=0
    #allocation2 [shape = 'u8[32768]{0}', space=vmem, size = 0x8000, scoped, tag = 'input window, operand 0']
    #allocation3 [shape = 's32[2]{0}', space=sflag, size = 0x8, scoped, tag = 'scoped memory for tpu_custom_call.1']
    #allocation4 [shape = 's32[2]{0}', space=sflag, size = 0x8, scoped, tag = 'scoped memory for tpu_custom_call.1']
    #allocation5 [shape = 'u8[262144]{0}', space=vmem, size = 0x40000, scoped, tag = 'input window, operand 1, single buffered']
    #allocation6 [shape = 's32[1]{0}', space=sflag, size = 0x4, scoped, tag = 'scoped memory for tpu_custom_call.1']
    #allocation7 [shape = 'u8[262144]{0}', space=vmem, size = 0x40000, scoped, tag = 'input window, operand 3, single buffered']
    #allocation8 [shape = 'u8[32768]{0}', space=vmem, size = 0x8000, scoped, tag = 'output window, operand 0']
    #allocation9 [shape = 'u8[32768]{0}', space=vmem, size = 0x8000, scoped, tag = 'output window, operand 1']
    #allocation10 [shape = 's32[2]{0}', space=sflag, size = 0x8, scoped, tag = 'scoped memory for tpu_custom_call.1']
    %12 = vsyncpa [#allocation3], 0
    %s13 = scalar_lea.sflag [#allocation3], 1
    %14 = vsyncpa %s13, 0
    %15 = vsyncpa [#allocation6], 0
    %16 = vsyncpa [#allocation4], 0
    %s17 = scalar_lea.sflag [#allocation4], 1
    %18 = vsyncpa %s17, 0
    %19 = vsyncpa [#allocation10], 0
    %s20 = scalar_lea.sflag [#allocation10], 1
    %21 = vsyncpa %s20, 0
    loop: start=0, step=1, limit=4
    $region2: #{tpu_custom_call.1} parent=1 // loop_pre_header
      _
    $region3: #{tpu_custom_call.1} parent=1 // loop_header
      %s23 = sphi 0, %s27
      %p24 = scmp.ge.s32.totalorder %s23, 4
      %s33 = sphi 0, %s35
      %s36 = sphi 0, %s33
      %s37 = sphi 0, %s36
      %s53 = sphi 0, %s37
      %s57 = sphi 0, %s57
      %s59 = sphi 0, %s57
      %s60 = sphi 0, %s59
      %s74 = sphi 0, %s60
      %s78 = sphi 0, %s78
      %s80 = sphi 0, %s78
      %s81 = sphi 0, %s80
      %s95 = sphi 0, %s81
      %s99 = sphi 0, %s99
      %s101 = sphi 0, %s99
      %s102 = sphi 0, %s101
      %s116 = sphi 0, %s102
      %s120 = sphi 0, %s120
      %s122 = sphi 0, %s120
      %s123 = sphi 0, %s122
      %s137 = sphi 0, %s123
      %s143 = sphi 0, %s145
      %s146 = sphi 0, %s143
      %s147 = sphi 0, %s146
      %s163 = sphi 0, %s147
      %s169 = sphi 0, %s171
      %s172 = sphi 0, %s169
      %s173 = sphi 0, %s172
      %s189 = sphi 0, %s173
    $region4: #{tpu_custom_call.1} parent=1 // loop_header_branch
      %26 = sbr.rel (%p24) target = $region8
    $region5: #{tpu_custom_call.1} parent=1 // loop_body
      %s28 = ssub.s32 %s23, 1
      %s29 = ssub.s32 %s23, 2
      %s30 = sadd.s32 %s23, 1
      %s31 = ssub.s32 %s23, %s30
      %p32 = scmp.eq.s32.totalorder %s31, 0
      %s34 = sadd.s32 %s33, 1
      %s35 = scalar_select %p32, %s33, %s34
      %p38 = pneg %p32
      %p39 = scmp.eq.s32.totalorder %s23, 1
      %p40 = por %p38, %p39
      %p41 = scmp.ne.s32.totalorder %s33, %s36
      %p42 = scmp.eq.s32.totalorder %s23, 0
      %p43 = por %p41, %p42
      %p44 = scmp.ne.s32.totalorder %s33, %s36
      %p45 = scmp.eq.s32.totalorder %s28, 1
      %p46 = por %p44, %p45
      %p47 = scmp.ne.s32.totalorder %s36, %s37
      %p48 = scmp.eq.s32.totalorder %s28, 0
      %p49 = por %p47, %p48
      %p50 = scmp.ne.s32.totalorder %s36, %s37
      %p51 = scmp.eq.s32.totalorder %s29, 1
      %p52 = por %p50, %p51
      %p54 = scmp.ne.s32.totalorder %s37, %s53
      %p55 = scmp.eq.s32.totalorder %s29, 0
      %p56 = por %p54, %p55
      %s58 = sadd.s32 %s57, 1
      %p61 = scmp.eq.s32.totalorder %s23, 1
      %p62 = scmp.ne.s32.totalorder %s57, %s59
      %p63 = scmp.eq.s32.totalorder %s23, 0
      %p64 = por %p62, %p63
      %p65 = scmp.ne.s32.totalorder %s57, %s59
      %p66 = scmp.eq.s32.totalorder %s28, 1
      %p67 = por %p65, %p66
      %p68 = scmp.ne.s32.totalorder %s59, %s60
      %p69 = scmp.eq.s32.totalorder %s28, 0
      %p70 = por %p68, %p69
      %p71 = scmp.ne.s32.totalorder %s59, %s60
      %p72 = scmp.eq.s32.totalorder %s29, 1
      %p73 = por %p71, %p72
      %p75 = scmp.ne.s32.totalorder %s60, %s74
      %p76 = scmp.eq.s32.totalorder %s29, 0
      %p77 = por %p75, %p76
      %s79 = sadd.s32 %s78, 1
      %p82 = scmp.eq.s32.totalorder %s23, 1
      %p83 = scmp.ne.s32.totalorder %s78, %s80
      %p84 = scmp.eq.s32.totalorder %s23, 0
      %p85 = por %p83, %p84
      %p86 = scmp.ne.s32.totalorder %s78, %s80
      %p87 = scmp.eq.s32.totalorder %s28, 1
      %p88 = por %p86, %p87
      %p89 = scmp.ne.s32.totalorder %s80, %s81
      %p90 = scmp.eq.s32.totalorder %s28, 0
      %p91 = por %p89, %p90
      %p92 = scmp.ne.s32.totalorder %s80, %s81
      %p93 = scmp.eq.s32.totalorder %s29, 1
      %p94 = por %p92, %p93
      %p96 = scmp.ne.s32.totalorder %s81, %s95
      %p97 = scmp.eq.s32.totalorder %s29, 0
      %p98 = por %p96, %p97
      %s100 = sadd.s32 %s99, 1
      %p103 = scmp.eq.s32.totalorder %s23, 1
      %p104 = scmp.ne.s32.totalorder %s99, %s101
      %p105 = scmp.eq.s32.totalorder %s23, 0
      %p106 = por %p104, %p105
      %p107 = scmp.ne.s32.totalorder %s99, %s101
      %p108 = scmp.eq.s32.totalorder %s28, 1
      %p109 = por %p107, %p108
      %p110 = scmp.ne.s32.totalorder %s101, %s102
      %p111 = scmp.eq.s32.totalorder %s28, 0
      %p112 = por %p110, %p111
      %p113 = scmp.ne.s32.totalorder %s101, %s102
      %p114 = scmp.eq.s32.totalorder %s29, 1
      %p115 = por %p113, %p114
      %p117 = scmp.ne.s32.totalorder %s102, %s116
      %p118 = scmp.eq.s32.totalorder %s29, 0
      %p119 = por %p117, %p118
      %s121 = sadd.s32 %s120, 1
      %p124 = scmp.eq.s32.totalorder %s23, 1
      %p125 = scmp.ne.s32.totalorder %s120, %s122
      %p126 = scmp.eq.s32.totalorder %s23, 0
      %p127 = por %p125, %p126
      %p128 = scmp.ne.s32.totalorder %s120, %s122
      %p129 = scmp.eq.s32.totalorder %s28, 1
      %p130 = por %p128, %p129
      %p131 = scmp.ne.s32.totalorder %s122, %s123
      %p132 = scmp.eq.s32.totalorder %s28, 0
      %p133 = por %p131, %p132
      %p134 = scmp.ne.s32.totalorder %s122, %s123
      %p135 = scmp.eq.s32.totalorder %s29, 1
      %p136 = por %p134, %p135
      %p138 = scmp.ne.s32.totalorder %s123, %s137
      %p139 = scmp.eq.s32.totalorder %s29, 0
      %p140 = por %p138, %p139
      %s141 = ssub.s32 %s23, %s30
      %p142 = scmp.eq.s32.totalorder %s141, 0
      %s144 = sadd.s32 %s143, 1
      %s145 = scalar_select %p142, %s143, %s144
      %p148 = pneg %p142
      %p149 = scmp.eq.s32.totalorder %s23, 1
      %p150 = por %p148, %p149
      %p151 = scmp.ne.s32.totalorder %s143, %s146
      %p152 = scmp.eq.s32.totalorder %s23, 0
      %p153 = por %p151, %p152
      %p154 = scmp.ne.s32.totalorder %s143, %s146
      %p155 = scmp.eq.s32.totalorder %s28, 1
      %p156 = por %p154, %p155
      %p157 = scmp.ne.s32.totalorder %s146, %s147
      %p158 = scmp.eq.s32.totalorder %s28, 0
      %p159 = por %p157, %p158
      %p160 = scmp.ne.s32.totalorder %s146, %s147
      %p161 = scmp.eq.s32.totalorder %s29, 1
      %p162 = por %p160, %p161
      %p164 = scmp.ne.s32.totalorder %s147, %s163
      %p165 = scmp.eq.s32.totalorder %s29, 0
      %p166 = por %p164, %p165
      %s167 = ssub.s32 %s23, %s30
      %p168 = scmp.eq.s32.totalorder %s167, 0
      %s170 = sadd.s32 %s169, 1
      %s171 = scalar_select %p168, %s169, %s170
      %p174 = pneg %p168
      %p175 = scmp.eq.s32.totalorder %s23, 1
      %p176 = por %p174, %p175
      %p177 = scmp.ne.s32.totalorder %s169, %s172
      %p178 = scmp.eq.s32.totalorder %s23, 0
      %p179 = por %p177, %p178
      %p180 = scmp.ne.s32.totalorder %s169, %s172
      %p181 = scmp.eq.s32.totalorder %s28, 1
      %p182 = por %p180, %p181
      %p183 = scmp.ne.s32.totalorder %s172, %s173
      %p184 = scmp.eq.s32.totalorder %s28, 0
      %p185 = por %p183, %p184
      %p186 = scmp.ne.s32.totalorder %s172, %s173
      %p187 = scmp.eq.s32.totalorder %s29, 1
      %p188 = por %p186, %p187
      %p190 = scmp.ne.s32.totalorder %s173, %s189
      %p191 = scmp.eq.s32.totalorder %s29, 0
      %p192 = por %p190, %p191
      %p193 = scmp.le.s32.totalorder 1, %s23
      %p194 = scmp.lt.s32.totalorder %s23, 3
      %p195 = pnand %p193, %p194
      %p196 = pneg %p195
      // Predicated region
      $region9: #{tpu_custom_call.1} parent=5 // pred_check
        _
      $region10: #{tpu_custom_call.1} parent=5 // pred_check_branch
        %198 = sbr.rel (%p195) target = $region12
      $region11: #{tpu_custom_call.1} parent=5 // pred_region
        %s199 = ssub.s32 %s23, 1
        // Predicated region
        $region13: #{tpu_custom_call.1} parent=11 // pred_check
          %p200 = pneg %p70
        $region14: #{tpu_custom_call.1} parent=11 // pred_check_branch
          %202 = sbr.rel (%p200) target = $region16
        $region15: #{tpu_custom_call.1} parent=11 // pred_region
          %s204 = ssub.s32 8192, 8192
          %205 = vsyncadd [#allocation6], %s204
          %s206 = sshll.u32 [#allocation5], 4
          %s207 = int_to_ptr.vmem [resolvable:$true] %s206
          %212 = dma.hbm_to_vmem [thread:$0]  %s1, 8192, %s207, [#allocation6], 256, 256, 16
        $region16: #{tpu_custom_call.1} parent=11 // pred_fallthru
          _
        // Predicated region
        $region17: #{tpu_custom_call.1} parent=11 // pred_check
          %p213 = pneg %p91
        $region18: #{tpu_custom_call.1} parent=11 // pred_check_branch
          %215 = sbr.rel (%p213) target = $region20
        $region19: #{tpu_custom_call.1} parent=11 // pred_region
          _
        $region20: #{tpu_custom_call.1} parent=11 // pred_fallthru
          _
        // Predicated region
        $region21: #{tpu_custom_call.1} parent=11 // pred_check
          %p216 = pneg %p112
        $region22: #{tpu_custom_call.1} parent=11 // pred_check_branch
          %218 = sbr.rel (%p216) target = $region24
        $region23: #{tpu_custom_call.1} parent=11 // pred_region
          %s220 = ssub.s32 8192, 8192
          %221 = vsyncadd [#allocation6], %s220
          %s222 = sshll.u32 [#allocation7], 4
          %s223 = int_to_ptr.vmem [resolvable:$true] %s222
          %228 = dma.hbm_to_vmem [thread:$0]  %s3, 8192, %s223, [#allocation6], 256, 256, 16
        $region24: #{tpu_custom_call.1} parent=11 // pred_fallthru
          _
        // Predicated region
        $region25: #{tpu_custom_call.1} parent=11 // pred_check
          %p229 = pneg %p133
        $region26: #{tpu_custom_call.1} parent=11 // pred_check_branch
          %231 = sbr.rel (%p229) target = $region28
        $region27: #{tpu_custom_call.1} parent=11 // pred_region
          _
        $region28: #{tpu_custom_call.1} parent=11 // pred_fallthru
          _
      $region12: #{tpu_custom_call.1} parent=5 // pred_fallthru
        _
      %p232 = scmp.lt.s32.totalorder %s23, 2
      // Predicated region
      $region29: #{tpu_custom_call.1} parent=5 // pred_check
        %p233 = pneg %p232
      $region30: #{tpu_custom_call.1} parent=5 // pred_check_branch
        %235 = sbr.rel (%p233) target = $region32
      $region31: #{tpu_custom_call.1} parent=5 // pred_region
        // Predicated region
        $region33: #{tpu_custom_call.1} parent=31 // pred_check
          %p236 = pneg %p43
        $region34: #{tpu_custom_call.1} parent=31 // pred_check_branch
          %238 = sbr.rel (%p236) target = $region36
        $region35: #{tpu_custom_call.1} parent=31 // pred_region
          %s239 = sand.u32 %s33, 1
          %s240 = scalar_lea.sflag [#allocation3], %s239
          %s241 = sand.u32 %s33, 1
          %s242 = smul.addr %s241, 32
          %s243 = scalar_lea.vmem [#allocation2], %s242
          %s245 = ssub.s32 512, 512
          %246 = vsyncadd %s240, %s245
          %s247 = smul.addr %s23, 4
          %s248 = smul.addr %s247, 128
          %s249 = scalar_lea.hbm %s0, %s248
          %s250 = sshll.u32 %s243, 4
          %s251 = int_to_ptr.vmem [resolvable:$true] %s250
          %256 = dma.hbm_to_vmem [thread:$0]  %s249, 512, %s251, %s240, 256, 256, 16
        $region36: #{tpu_custom_call.1} parent=31 // pred_fallthru
          _
      $region32: #{tpu_custom_call.1} parent=5 // pred_fallthru
        _
      %p257 = scmp.le.s32.totalorder 1, %s23
      %p258 = scmp.lt.s32.totalorder %s23, 3
      %p259 = pnand %p257, %p258
      %p260 = pneg %p259
      // Predicated region
      $region37: #{tpu_custom_call.1} parent=5 // pred_check
        _
      $region38: #{tpu_custom_call.1} parent=5 // pred_check_branch
        %262 = sbr.rel (%p259) target = $region40
      $region39: #{tpu_custom_call.1} parent=5 // pred_region
        %s263 = ssub.s32 %s23, 1
        %s264 = sand.u32 %s36, 1
        %s265 = scalar_lea.sflag [#allocation3], %s264
        %s266 = sand.u32 %s36, 1
        %s267 = smul.addr %s266, 32
        %s268 = scalar_lea.vmem [#allocation2], %s267
        // Predicated region
        $region41: #{tpu_custom_call.1} parent=39 // pred_check
          %p269 = pneg %p49
        $region42: #{tpu_custom_call.1} parent=39 // pred_check_branch
          %271 = sbr.rel (%p269) target = $region44
        $region43: #{tpu_custom_call.1} parent=39 // pred_region
          %272 = dma.done %s265, 512
        $region44: #{tpu_custom_call.1} parent=39 // pred_fallthru
          _
        // Predicated region
        $region45: #{tpu_custom_call.1} parent=39 // pred_check
          %p273 = pneg %p70
        $region46: #{tpu_custom_call.1} parent=39 // pred_check_branch
          %275 = sbr.rel (%p273) target = $region48
        $region47: #{tpu_custom_call.1} parent=39 // pred_region
          %276 = dma.done [#allocation6], 8192
        $region48: #{tpu_custom_call.1} parent=39 // pred_fallthru
          _
        // Predicated region
        $region49: #{tpu_custom_call.1} parent=39 // pred_check
          %p277 = pneg %p112
        $region50: #{tpu_custom_call.1} parent=39 // pred_check_branch
          %279 = sbr.rel (%p277) target = $region52
        $region51: #{tpu_custom_call.1} parent=39 // pred_region
          %280 = dma.done [#allocation6], 8192
        $region52: #{tpu_custom_call.1} parent=39 // pred_fallthru
          _
        %s281 = sand.u32 %s36, 1
        %s282 = scalar_lea.sflag [#allocation3], %s281
        %s283 = sand.u32 %s36, 1
        %s284 = smul.addr %s283, 32
        %s285 = scalar_lea.vmem [#allocation2], %s284
        %p286 = pneg %p49
        %p287 = pneg %p46
        %p288 = pneg %p70
        %p289 = pneg %p67
        %p290 = pneg %p91
        %p291 = pneg %p88
        %p292 = pneg %p112
        %p293 = pneg %p109
        %p294 = pneg %p133
        %p295 = pneg %p130
        %p296 = pneg %p159
        %p297 = pneg %p156
        %s298 = sand.u32 %s146, 1
        %s299 = scalar_lea.sflag [#allocation4], %s298
        %s300 = sand.u32 %s146, 1
        %s301 = smul.addr %s300, 32
        %s302 = scalar_lea.vmem [#allocation8], %s301
        %p303 = pneg %p185
        %p304 = pneg %p182
        %s305 = sand.u32 %s172, 1
        %s306 = scalar_lea.sflag [#allocation10], %s305
        %s307 = sand.u32 %s172, 1
        %s308 = smul.addr %s307, 32
        %s309 = scalar_lea.vmem [#allocation9], %s308
        %v310 = vld [vmem:[%s268] sm:$0xff]
        %v311 = vld [vmem:[%s268 + $0x8] sm:$0xff]
        %v312 = vld [vmem:[%s268 + $0x10] sm:$0xff]
        %v313 = vld [vmem:[%s268 + $0x18] sm:$0xff]
        %v314 = vld [vmem:[#allocation5] sm:$0xff]
        %v315 = vld [vmem:[#allocation5 + $0x8] sm:$0xff]
        %v316 = vld [vmem:[#allocation5 + $0x10] sm:$0xff]
        %v317 = vld [vmem:[#allocation5 + $0x18] sm:$0xff]
        %v318 = vld [vmem:[#allocation5 + $0x20] sm:$0xff]
        %v319 = vld [vmem:[#allocation5 + $0x28] sm:$0xff]
        %v320 = vld [vmem:[#allocation5 + $0x30] sm:$0xff]
        %v321 = vld [vmem:[#allocation5 + $0x38] sm:$0xff]
        %v322 = vld [vmem:[#allocation5 + $0x40] sm:$0xff]
        %v323 = vld [vmem:[#allocation5 + $0x48] sm:$0xff]
        %v324 = vld [vmem:[#allocation5 + $0x50] sm:$0xff]
        %v325 = vld [vmem:[#allocation5 + $0x58] sm:$0xff]
        %v326 = vld [vmem:[#allocation5 + $0x60] sm:$0xff]
        %v327 = vld [vmem:[#allocation5 + $0x68] sm:$0xff]
        %v328 = vld [vmem:[#allocation5 + $0x70] sm:$0xff]
        %v329 = vld [vmem:[#allocation5 + $0x78] sm:$0xff]
        %v330 = vld [vmem:[#allocation5 + $0x80] sm:$0xff]
        %v331 = vld [vmem:[#allocation5 + $0x88] sm:$0xff]
        %v332 = vld [vmem:[#allocation5 + $0x90] sm:$0xff]
        %v333 = vld [vmem:[#allocation5 + $0x98] sm:$0xff]
        %v334 = vld [vmem:[#allocation5 + $0xa0] sm:$0xff]
        %v335 = vld [vmem:[#allocation5 + $0xa8] sm:$0xff]
        %v336 = vld [vmem:[#allocation5 + $0xb0] sm:$0xff]
        %v337 = vld [vmem:[#allocation5 + $0xb8] sm:$0xff]
        %v338 = vld [vmem:[#allocation5 + $0xc0] sm:$0xff]
        %v339 = vld [vmem:[#allocation5 + $0xc8] sm:$0xff]
        %v340 = vld [vmem:[#allocation5 + $0xd0] sm:$0xff]
        %v341 = vld [vmem:[#allocation5 + $0xd8] sm:$0xff]
        %v342 = vld [vmem:[#allocation5 + $0xe0] sm:$0xff]
        %v343 = vld [vmem:[#allocation5 + $0xe8] sm:$0xff]
        %v344 = vld [vmem:[#allocation5 + $0xf0] sm:$0xff]
        %v345 = vld [vmem:[#allocation5 + $0xf8] sm:$0xff]
        %v346 = vld [vmem:[#allocation5 + $0x100] sm:$0xff]
        %v347 = vld [vmem:[#allocation5 + $0x108] sm:$0xff]
        %v348 = vld [vmem:[#allocation5 + $0x110] sm:$0xff]
        %v349 = vld [vmem:[#allocation5 + $0x118] sm:$0xff]
        %v350 = vld [vmem:[#allocation5 + $0x120] sm:$0xff]
        %v351 = vld [vmem:[#allocation5 + $0x128] sm:$0xff]
        %v352 = vld [vmem:[#allocation5 + $0x130] sm:$0xff]
        %v353 = vld [vmem:[#allocation5 + $0x138] sm:$0xff]
        %v354 = vld [vmem:[#allocation5 + $0x140] sm:$0xff]
        %v355 = vld [vmem:[#allocation5 + $0x148] sm:$0xff]
        %v356 = vld [vmem:[#allocation5 + $0x150] sm:$0xff]
        %v357 = vld [vmem:[#allocation5 + $0x158] sm:$0xff]
        %v358 = vld [vmem:[#allocation5 + $0x160] sm:$0xff]
        %v359 = vld [vmem:[#allocation5 + $0x168] sm:$0xff]
        %v360 = vld [vmem:[#allocation5 + $0x170] sm:$0xff]
        %v361 = vld [vmem:[#allocation5 + $0x178] sm:$0xff]
        %v362 = vld [vmem:[#allocation5 + $0x180] sm:$0xff]
        %v363 = vld [vmem:[#allocation5 + $0x188] sm:$0xff]
        %v364 = vld [vmem:[#allocation5 + $0x190] sm:$0xff]
        %v365 = vld [vmem:[#allocation5 + $0x198] sm:$0xff]
        %v366 = vld [vmem:[#allocation5 + $0x1a0] sm:$0xff]
        %v367 = vld [vmem:[#allocation5 + $0x1a8] sm:$0xff]
        %v368 = vld [vmem:[#allocation5 + $0x1b0] sm:$0xff]
        %v369 = vld [vmem:[#allocation5 + $0x1b8] sm:$0xff]
        %v370 = vld [vmem:[#allocation5 + $0x1c0] sm:$0xff]
        %v371 = vld [vmem:[#allocation5 + $0x1c8] sm:$0xff]
        %v372 = vld [vmem:[#allocation5 + $0x1d0] sm:$0xff]
        %v373 = vld [vmem:[#allocation5 + $0x1d8] sm:$0xff]
        %v374 = vld [vmem:[#allocation5 + $0x1e0] sm:$0xff]
        %v375 = vld [vmem:[#allocation5 + $0x1e8] sm:$0xff]
        %v376 = vld [vmem:[#allocation5 + $0x1f0] sm:$0xff]
        %v377 = vld [vmem:[#allocation5 + $0x1f8] sm:$0xff]
        %v378 = vld [vmem:[%s2] sm:$0x3]
        %v380 = vlaneseq
        %v381 = vshrl.u32 %v380, 7
        %v382 = vsub.s32 0, %v381
        %v383 = vrot.slane %v378, %v382
        %v384 = vlaneseq
        %v385 = vshrl.u32 %v384, 7
        %v386 = vsub.s32 1, %v385
        %v387 = vrot.slane %v378, %v386
        %390 = vmatprep.subr.mxu0 %v345
        %391 = vmatpush1.msra.mxu0 %v344
        %392 = vmatprep.subr.mxu0 %v343
        %393 = vmatpush1.msra.mxu0 %v342
        %394 = vmatprep.subr.mxu0 %v341
        %395 = vmatpush1.msra.mxu0 %v340
        %396 = vmatprep.subr.mxu0 %v339
        %397 = vmatpush1.msra.mxu0 %v338
        %398 = vmatprep.subr.mxu0 %v337
        %399 = vmatpush1.msra.mxu0 %v336
        %400 = vmatprep.subr.mxu0 %v335
        %401 = vmatpush1.msra.mxu0 %v334
        %402 = vmatprep.subr.mxu0 %v333
        %403 = vmatpush1.msra.mxu0 %v332
        %404 = vmatprep.subr.mxu0 %v331
        %405 = vmatpush1.msra.mxu0 %v330
        %406 = vmatprep.subr.mxu0 %v329
        %407 = vmatpush1.msra.mxu0 %v328
        %408 = vmatprep.subr.mxu0 %v327
        %409 = vmatpush1.msra.mxu0 %v326
        %410 = vmatprep.subr.mxu0 %v325
        %411 = vmatpush1.msra.mxu0 %v324
        %412 = vmatprep.subr.mxu0 %v323
        %413 = vmatpush1.msra.mxu0 %v322
        %414 = vmatprep.subr.mxu0 %v321
        %415 = vmatpush1.msra.mxu0 %v320
        %416 = vmatprep.subr.mxu0 %v319
        %417 = vmatpush1.msra.mxu0 %v318
        %418 = vmatprep.subr.mxu0 %v317
        %419 = vmatpush1.msra.mxu0 %v316
        %420 = vmatprep.subr.mxu0 %v315
        %421 = vmatpush1.msra.mxu0 %v314
        %422 = vmatprep.subr.mxu0 %v377
        %423 = vmatpush2.msra.mxu0 %v376
        %424 = vmatprep.subr.mxu0 %v375
        %425 = vmatpush2.msra.mxu0 %v374
        %426 = vmatprep.subr.mxu0 %v373
        %427 = vmatpush2.msra.mxu0 %v372
        %428 = vmatprep.subr.mxu0 %v371
        %429 = vmatpush2.msra.mxu0 %v370
        %430 = vmatprep.subr.mxu0 %v369
        %431 = vmatpush2.msra.mxu0 %v368
        %432 = vmatprep.subr.mxu0 %v367
        %433 = vmatpush2.msra.mxu0 %v366
        %434 = vmatprep.subr.mxu0 %v365
        %435 = vmatpush2.msra.mxu0 %v364
        %436 = vmatprep.subr.mxu0 %v363
        %437 = vmatpush2.msra.mxu0 %v362
        %438 = vmatprep.subr.mxu0 %v361
        %439 = vmatpush2.msra.mxu0 %v360
        %440 = vmatprep.subr.mxu0 %v359
        %441 = vmatpush2.msra.mxu0 %v358
        %442 = vmatprep.subr.mxu0 %v357
        %443 = vmatpush2.msra.mxu0 %v356
        %444 = vmatprep.subr.mxu0 %v355
        %445 = vmatpush2.msra.mxu0 %v354
        %446 = vmatprep.subr.mxu0 %v353
        %447 = vmatpush2.msra.mxu0 %v352
        %448 = vmatprep.subr.mxu0 %v351
        %449 = vmatpush2.msra.mxu0 %v350
        %450 = vmatprep.subr.mxu0 %v349
        %451 = vmatpush2.msra.mxu0 %v348
        %452 = vmatprep.subr.mxu0 %v347
        %453 = vmatpush2.msra.mxu0 %v346
        %454 = vmatprep.mubr.f32.mxu0 %v311
        %455 = vmatmul.mubr.f32.gmra.mxu0 %v310
        %v456 = vpop.f32.mrf.mxu0
        %v457 = vadd.f32 %v383, %v456
        %v458 = vpop.f32.mrf.mxu0
        %v459 = vadd.f32 %v387, %v458
        %460 = vmatprep.mubr.f32.mxu0 %v313
        %461 = vmatmul.mubr.f32.gmra.mxu0 %v312
        %v462 = vpop.f32.mrf.mxu0
        %v463 = vadd.f32 %v383, %v462
        %v464 = vpop.f32.mrf.mxu0
        %v465 = vadd.f32 %v387, %v464
        %466 = vdwg.mxu0
        %v467 = vld [vmem:[#allocation7] sm:$0xff]
        %v468 = vld [vmem:[#allocation7 + $0x8] sm:$0xff]
        %v469 = vld [vmem:[#allocation7 + $0x10] sm:$0xff]
        %v470 = vld [vmem:[#allocation7 + $0x18] sm:$0xff]
        %v471 = vld [vmem:[#allocation7 + $0x20] sm:$0xff]
        %v472 = vld [vmem:[#allocation7 + $0x28] sm:$0xff]
        %v473 = vld [vmem:[#allocation7 + $0x30] sm:$0xff]
        %v474 = vld [vmem:[#allocation7 + $0x38] sm:$0xff]
        %v475 = vld [vmem:[#allocation7 + $0x40] sm:$0xff]
        %v476 = vld [vmem:[#allocation7 + $0x48] sm:$0xff]
        %v477 = vld [vmem:[#allocation7 + $0x50] sm:$0xff]
        %v478 = vld [vmem:[#allocation7 + $0x58] sm:$0xff]
        %v479 = vld [vmem:[#allocation7 + $0x60] sm:$0xff]
        %v480 = vld [vmem:[#allocation7 + $0x68] sm:$0xff]
        %v481 = vld [vmem:[#allocation7 + $0x70] sm:$0xff]
        %v482 = vld [vmem:[#allocation7 + $0x78] sm:$0xff]
        %v483 = vld [vmem:[#allocation7 + $0x80] sm:$0xff]
        %v484 = vld [vmem:[#allocation7 + $0x88] sm:$0xff]
        %v485 = vld [vmem:[#allocation7 + $0x90] sm:$0xff]
        %v486 = vld [vmem:[#allocation7 + $0x98] sm:$0xff]
        %v487 = vld [vmem:[#allocation7 + $0xa0] sm:$0xff]
        %v488 = vld [vmem:[#allocation7 + $0xa8] sm:$0xff]
        %v489 = vld [vmem:[#allocation7 + $0xb0] sm:$0xff]
        %v490 = vld [vmem:[#allocation7 + $0xb8] sm:$0xff]
        %v491 = vld [vmem:[#allocation7 + $0xc0] sm:$0xff]
        %v492 = vld [vmem:[#allocation7 + $0xc8] sm:$0xff]
        %v493 = vld [vmem:[#allocation7 + $0xd0] sm:$0xff]
        %v494 = vld [vmem:[#allocation7 + $0xd8] sm:$0xff]
        %v495 = vld [vmem:[#allocation7 + $0xe0] sm:$0xff]
        %v496 = vld [vmem:[#allocation7 + $0xe8] sm:$0xff]
        %v497 = vld [vmem:[#allocation7 + $0xf0] sm:$0xff]
        %v498 = vld [vmem:[#allocation7 + $0xf8] sm:$0xff]
        %v499 = vld [vmem:[#allocation7 + $0x100] sm:$0xff]
        %v500 = vld [vmem:[#allocation7 + $0x108] sm:$0xff]
        %v501 = vld [vmem:[#allocation7 + $0x110] sm:$0xff]
        %v502 = vld [vmem:[#allocation7 + $0x118] sm:$0xff]
        %v503 = vld [vmem:[#allocation7 + $0x120] sm:$0xff]
        %v504 = vld [vmem:[#allocation7 + $0x128] sm:$0xff]
        %v505 = vld [vmem:[#allocation7 + $0x130] sm:$0xff]
        %v506 = vld [vmem:[#allocation7 + $0x138] sm:$0xff]
        %v507 = vld [vmem:[#allocation7 + $0x140] sm:$0xff]
        %v508 = vld [vmem:[#allocation7 + $0x148] sm:$0xff]
        %v509 = vld [vmem:[#allocation7 + $0x150] sm:$0xff]
        %v510 = vld [vmem:[#allocation7 + $0x158] sm:$0xff]
        %v511 = vld [vmem:[#allocation7 + $0x160] sm:$0xff]
        %v512 = vld [vmem:[#allocation7 + $0x168] sm:$0xff]
        %v513 = vld [vmem:[#allocation7 + $0x170] sm:$0xff]
        %v514 = vld [vmem:[#allocation7 + $0x178] sm:$0xff]
        %v515 = vld [vmem:[#allocation7 + $0x180] sm:$0xff]
        %v516 = vld [vmem:[#allocation7 + $0x188] sm:$0xff]
        %v517 = vld [vmem:[#allocation7 + $0x190] sm:$0xff]
        %v518 = vld [vmem:[#allocation7 + $0x198] sm:$0xff]
        %v519 = vld [vmem:[#allocation7 + $0x1a0] sm:$0xff]
        %v520 = vld [vmem:[#allocation7 + $0x1a8] sm:$0xff]
        %v521 = vld [vmem:[#allocation7 + $0x1b0] sm:$0xff]
        %v522 = vld [vmem:[#allocation7 + $0x1b8] sm:$0xff]
        %v523 = vld [vmem:[#allocation7 + $0x1c0] sm:$0xff]
        %v524 = vld [vmem:[#allocation7 + $0x1c8] sm:$0xff]
        %v525 = vld [vmem:[#allocation7 + $0x1d0] sm:$0xff]
        %v526 = vld [vmem:[#allocation7 + $0x1d8] sm:$0xff]
        %v527 = vld [vmem:[#allocation7 + $0x1e0] sm:$0xff]
        %v528 = vld [vmem:[#allocation7 + $0x1e8] sm:$0xff]
        %v529 = vld [vmem:[#allocation7 + $0x1f0] sm:$0xff]
        %v530 = vld [vmem:[#allocation7 + $0x1f8] sm:$0xff]
        %v531 = vld [vmem:[%s4] sm:$0x3]
        %v533 = vlaneseq
        %v534 = vshrl.u32 %v533, 7
        %v535 = vsub.s32 0, %v534
        %v536 = vrot.slane %v531, %v535
        %v537 = vlaneseq
        %v538 = vshrl.u32 %v537, 7
        %v539 = vsub.s32 1, %v538
        %v540 = vrot.slane %v531, %v539
        %543 = vmatprep.subr.mxu0 %v498
        %544 = vmatpush1.msra.mxu0 %v497
        %545 = vmatprep.subr.mxu0 %v496
        %546 = vmatpush1.msra.mxu0 %v495
        %547 = vmatprep.subr.mxu0 %v494
        %548 = vmatpush1.msra.mxu0 %v493
        %549 = vmatprep.subr.mxu0 %v492
        %550 = vmatpush1.msra.mxu0 %v491
        %551 = vmatprep.subr.mxu0 %v490
        %552 = vmatpush1.msra.mxu0 %v489
        %553 = vmatprep.subr.mxu0 %v488
        %554 = vmatpush1.msra.mxu0 %v487
        %555 = vmatprep.subr.mxu0 %v486
        %556 = vmatpush1.msra.mxu0 %v485
        %557 = vmatprep.subr.mxu0 %v484
        %558 = vmatpush1.msra.mxu0 %v483
        %559 = vmatprep.subr.mxu0 %v482
        %560 = vmatpush1.msra.mxu0 %v481
        %561 = vmatprep.subr.mxu0 %v480
        %562 = vmatpush1.msra.mxu0 %v479
        %563 = vmatprep.subr.mxu0 %v478
        %564 = vmatpush1.msra.mxu0 %v477
        %565 = vmatprep.subr.mxu0 %v476
        %566 = vmatpush1.msra.mxu0 %v475
        %567 = vmatprep.subr.mxu0 %v474
        %568 = vmatpush1.msra.mxu0 %v473
        %569 = vmatprep.subr.mxu0 %v472
        %570 = vmatpush1.msra.mxu0 %v471
        %571 = vmatprep.subr.mxu0 %v470
        %572 = vmatpush1.msra.mxu0 %v469
        %573 = vmatprep.subr.mxu0 %v468
        %574 = vmatpush1.msra.mxu0 %v467
        %575 = vmatprep.subr.mxu0 %v530
        %576 = vmatpush2.msra.mxu0 %v529
        %577 = vmatprep.subr.mxu0 %v528
        %578 = vmatpush2.msra.mxu0 %v527
        %579 = vmatprep.subr.mxu0 %v526
        %580 = vmatpush2.msra.mxu0 %v525
        %581 = vmatprep.subr.mxu0 %v524
        %582 = vmatpush2.msra.mxu0 %v523
        %583 = vmatprep.subr.mxu0 %v522
        %584 = vmatpush2.msra.mxu0 %v521
        %585 = vmatprep.subr.mxu0 %v520
        %586 = vmatpush2.msra.mxu0 %v519
        %587 = vmatprep.subr.mxu0 %v518
        %588 = vmatpush2.msra.mxu0 %v517
        %589 = vmatprep.subr.mxu0 %v516
        %590 = vmatpush2.msra.mxu0 %v515
        %591 = vmatprep.subr.mxu0 %v514
        %592 = vmatpush2.msra.mxu0 %v513
        %593 = vmatprep.subr.mxu0 %v512
        %594 = vmatpush2.msra.mxu0 %v511
        %595 = vmatprep.subr.mxu0 %v510
        %596 = vmatpush2.msra.mxu0 %v509
        %597 = vmatprep.subr.mxu0 %v508
        %598 = vmatpush2.msra.mxu0 %v507
        %599 = vmatprep.subr.mxu0 %v506
        %600 = vmatpush2.msra.mxu0 %v505
        %601 = vmatprep.subr.mxu0 %v504
        %602 = vmatpush2.msra.mxu0 %v503
        %603 = vmatprep.subr.mxu0 %v502
        %604 = vmatpush2.msra.mxu0 %v501
        %605 = vmatprep.subr.mxu0 %v500
        %606 = vmatpush2.msra.mxu0 %v499
        %607 = vmatprep.mubr.f32.mxu0 %v311
        %608 = vmatmul.mubr.f32.gmra.mxu0 %v310
        %v609 = vpop.f32.mrf.mxu0
        %v610 = vadd.f32 %v536, %v609
        %v611 = vpop.f32.mrf.mxu0
        %v612 = vadd.f32 %v540, %v611
        %613 = vmatprep.mubr.f32.mxu0 %v313
        %614 = vmatmul.mubr.f32.gmra.mxu0 %v312
        %v615 = vpop.f32.mrf.mxu0
        %v616 = vadd.f32 %v536, %v615
        %v617 = vpop.f32.mrf.mxu0
        %v618 = vadd.f32 %v540, %v617
        %619 = vdwg.mxu0
        %620 = vst [vmem:[%s302] sm:$0xff] %v457
        %621 = vst [vmem:[%s302 + $0x8] sm:$0xff] %v463
        %622 = vst [vmem:[%s309] sm:$0xff] %v610
        %623 = vst [vmem:[%s309 + $0x8] sm:$0xff] %v616
        %s624 = scalar_lea.vmem %s302, 16 [#allocation8]
        %625 = vst [vmem:[%s624] sm:$0xff] %v459
        %626 = vst [vmem:[%s624 + $0x8] sm:$0xff] %v465
        %s627 = scalar_lea.vmem %s309, 16 [#allocation9]
        %628 = vst [vmem:[%s627] sm:$0xff] %v612
        %629 = vst [vmem:[%s627 + $0x8] sm:$0xff] %v618
        %s630 = sand.u32 %s146, 1
        %s631 = scalar_lea.sflag [#allocation4], %s630
        %s632 = sand.u32 %s146, 1
        %s633 = smul.addr %s632, 32
        %s634 = scalar_lea.vmem [#allocation8], %s633
        %s635 = sand.u32 %s172, 1
        %s636 = scalar_lea.sflag [#allocation10], %s635
        %s637 = sand.u32 %s172, 1
        %s638 = smul.addr %s637, 32
        %s639 = scalar_lea.vmem [#allocation9], %s638
        // Predicated region
        $region53: #{tpu_custom_call.1} parent=39 // pred_check
          %p640 = pneg %p156
        $region54: #{tpu_custom_call.1} parent=39 // pred_check_branch
          %642 = sbr.rel (%p640) target = $region56
        $region55: #{tpu_custom_call.1} parent=39 // pred_region
          %s644 = ssub.s32 512, 512
          %645 = vsyncadd %s631, %s644
          %s646 = smul.addr %s28, 4
          %s647 = smul.addr %s646, 128
          %s648 = scalar_lea.hbm %s5, %s647
          %s649 = sshll.u32 %s634, 4
          %s650 = int_to_ptr.vmem [resolvable:$true] %s649
          %655 = dma.vmem_to_hbm [thread:$0]  %s650, 512, %s648, %s631, 128, 128, 8
        $region56: #{tpu_custom_call.1} parent=39 // pred_fallthru
          _
        // Predicated region
        $region57: #{tpu_custom_call.1} parent=39 // pred_check
          %p656 = pneg %p182
        $region58: #{tpu_custom_call.1} parent=39 // pred_check_branch
          %658 = sbr.rel (%p656) target = $region60
        $region59: #{tpu_custom_call.1} parent=39 // pred_region
          %s660 = ssub.s32 512, 512
          %661 = vsyncadd %s636, %s660
          %s662 = smul.addr %s28, 4
          %s663 = smul.addr %s662, 128
          %s664 = scalar_lea.hbm %s6, %s663
          %s665 = sshll.u32 %s639, 4
          %s666 = int_to_ptr.vmem [resolvable:$true] %s665
          %671 = dma.vmem_to_hbm [thread:$0]  %s666, 512, %s664, %s636, 128, 128, 8
        $region60: #{tpu_custom_call.1} parent=39 // pred_fallthru
          _
      $region40: #{tpu_custom_call.1} parent=5 // pred_fallthru
        _
      %p672 = scmp.le.s32.totalorder 2, %s23
      // Predicated region
      $region61: #{tpu_custom_call.1} parent=5 // pred_check
        %p673 = pneg %p672
      $region62: #{tpu_custom_call.1} parent=5 // pred_check_branch
        %675 = sbr.rel (%p673) target = $region64
      $region63: #{tpu_custom_call.1} parent=5 // pred_region
        %s676 = ssub.s32 %s23, 2
        // Predicated region
        $region65: #{tpu_custom_call.1} parent=63 // pred_check
          %p677 = pneg %p162
        $region66: #{tpu_custom_call.1} parent=63 // pred_check_branch
          %679 = sbr.rel (%p677) target = $region68
        $region67: #{tpu_custom_call.1} parent=63 // pred_region
          %s680 = sand.u32 %s147, 1
          %s681 = scalar_lea.sflag [#allocation4], %s680
          %s682 = sand.u32 %s147, 1
          %s683 = smul.addr %s682, 32
          %s684 = scalar_lea.vmem [#allocation8], %s683
          %685 = dma.done %s681, 512
        $region68: #{tpu_custom_call.1} parent=63 // pred_fallthru
          _
        // Predicated region
        $region69: #{tpu_custom_call.1} parent=63 // pred_check
          %p686 = pneg %p188
        $region70: #{tpu_custom_call.1} parent=63 // pred_check_branch
          %688 = sbr.rel (%p686) target = $region72
        $region71: #{tpu_custom_call.1} parent=63 // pred_region
          %s689 = sand.u32 %s173, 1
          %s690 = scalar_lea.sflag [#allocation10], %s689
          %s691 = sand.u32 %s173, 1
          %s692 = smul.addr %s691, 32
          %s693 = scalar_lea.vmem [#allocation9], %s692
          %694 = dma.done %s690, 512
        $region72: #{tpu_custom_call.1} parent=63 // pred_fallthru
          _
      $region64: #{tpu_custom_call.1} parent=5 // pred_fallthru
        _
    $region6: #{tpu_custom_call.1} parent=1 // loop_footer
      %s27 = sadd.s32 1, %s23
    $region7: #{tpu_custom_call.1} parent=1 // loop_footer_branch
      %22 = sbr.rel target = $region3
    $region8: #{tpu_custom_call.1} parent=1 // loop_exit
      _
    %695 = vsyncpa [#allocation3], 1
    %s696 = scalar_lea.sflag [#allocation3], 1
    %697 = vsyncpa %s696, 1
    %698 = vsyncpa [#allocation6], 1
    %699 = vsyncpa [#allocation4], 1
    %s700 = scalar_lea.sflag [#allocation4], 1
    %701 = vsyncpa %s700, 1
    %702 = vsyncpa [#allocation10], 1
    %s703 = scalar_lea.sflag [#allocation10], 1
    %704 = vsyncpa %s703, 1

</llo_original>
